<compile_context>
chip_gen: v7x
topology: tpu7x:2x2x1
jax: 0.10.0
libtpu: 0.0.40
codegen_flags: <defaults>
</compile_context>

<pallas_src>
import jax
import jax.numpy as jnp
from jax.experimental import pallas as pl
from jax.experimental.pallas import tpu as pltpu


def _conv1x1_kernel(w_ref, x_ref, o_ref):
    # w_ref: [tc_out, Cin], x_ref: [Cin, HW], o_ref: [tc_out, HW]
    o_ref[...] = jnp.dot(
        w_ref[...], x_ref[...], preferred_element_type=jnp.float32
    ).astype(o_ref.dtype)


def conv2d_1x1(x_nchw, weight_oihw, *, cout_block=128):
    """1x1, stride-1, bias-free conv on native NCHW layout.

    x_nchw: [N, Cin, H, W], weight_oihw: [Cout, Cin, 1, 1] -> [N, Cout, H, W]
    """
    N, Cin, H, W = x_nchw.shape
    Cout = weight_oihw.shape[0]
    HW = H * W

    # Free contiguous reshapes -- no transposes anywhere in the wrapper.
    x_mat = x_nchw.reshape(N, Cin, HW)          # [N, Cin, HW]
    w_mat = weight_oihw.reshape(Cout, Cin)      # [Cout, Cin]

    if Cout % cout_block != 0:
        cout_block = Cout
    n_cout_blocks = Cout // cout_block

    itemsize = jnp.dtype(x_nchw.dtype).itemsize
    cost = pl.CostEstimate(
        flops=2 * N * HW * Cin * Cout,
        transcendentals=0,
        bytes_accessed=(N * Cin * HW + Cout * Cin + N * Cout * HW) * itemsize,
    )

    out_mat = pl.pallas_call(
        _conv1x1_kernel,
        out_shape=jax.ShapeDtypeStruct((N, Cout, HW), x_nchw.dtype),
        grid=(N, n_cout_blocks),
        in_specs=[
            # Weight tile: [cout_block, Cin] -- sublane (128) / lane (1024)
            # aligned, re-used block index across n so it is not re-fetched.
            pl.BlockSpec((cout_block, Cin), lambda n, j: (j, 0)),
            # Activation slab for batch n: [Cin, HW]; last two dims equal the
            # full array extents, so the (8,128) rule is satisfied even though
            # HW=196 is not a multiple of 128. Same block across j -> no
            # redundant DMA between consecutive grid steps on one core.
            pl.BlockSpec((None, Cin, HW), lambda n, j: (n, 0, 0)),
        ],
        out_specs=pl.BlockSpec((None, cout_block, HW), lambda n, j: (n, j, 0)),
        compiler_params=pltpu.CompilerParams(
            dimension_semantics=("parallel", "parallel"),
        ),
        cost_estimate=cost,
    )(w_mat, x_mat)

    # Free contiguous reshape back to NCHW.
    return out_mat.reshape(N, Cout, H, W)


if __name__ == "__main__":
    key = jax.random.PRNGKey(0)
    k_x, k_w = jax.random.split(key)

    # Shapes implied by the module's forward: x440 = [1, 1024, 14, 14],
    # Conv2d(1024 -> 256, 1x1, no bias).
    N, Cin, H, W, Cout = 1, 1024, 14, 14, 256

    x = jax.random.normal(k_x, (N, Cin, H, W), dtype=jnp.float32)
    # Deterministic synthetic weight, kaiming-uniform-like scale (fan_in = Cin).
    bound = 1.0 / (Cin ** 0.5)
    w = jax.random.uniform(
        k_w, (Cout, Cin, 1, 1), dtype=jnp.float32, minval=-bound, maxval=bound
    )

    y = conv2d_1x1(x, w)
    jax.block_until_ready(y)

    # Sanity check against a plain-JAX reference of the same math.
    ref = jnp.einsum("nchw,oc->nohw", x, w.reshape(Cout, Cin))
    assert y.shape == (N, Cout, H, W), y.shape
    assert jnp.allclose(y, ref, atol=1e-4, rtol=1e-4)

    print("KERNEL_OK")
</pallas_src>

<mosaic_0001>
module attributes {stable_mosaic.version = 11 : i64} {
  func.func @_conv1x1_kernel(%arg0: i32, %arg1: i32, %arg2: memref<128x1024xf32, #tpu.memory_space<vmem>>, %arg3: memref<1x1024x196xf32, #tpu.memory_space<vmem>>, %arg4: memref<1x128x196xf32, #tpu.memory_space<vmem>>) attributes {dimension_semantics = [#tpu.dimension_semantics<parallel>, #tpu.dimension_semantics<parallel>], iteration_bounds = array<i64: 1, 2>, scalar_prefetch = 0 : i64, scratch_operands = 0 : i64, tpu.core_type = #tpu.core_type<tc>, window_params = [{transform_indices = @transform_0, window_bounds = array<i64: 128, 1024>}, {transform_indices = @transform_1, window_bounds = array<i64: 1, 1024, 196>}, {transform_indices = @transform_2, window_bounds = array<i64: 1, 128, 196>}]} {
    %c0 = arith.constant 0 : index
    %c0_0 = arith.constant 0 : index
    %0 = vector.load %arg2[%c0, %c0_0] : memref<128x1024xf32, #tpu.memory_space<vmem>>, vector<128x1024xf32>
    %c0_1 = arith.constant 0 : index
    %c0_2 = arith.constant 0 : index
    %c0_3 = arith.constant 0 : index
    %1 = vector.load %arg3[%c0_1, %c0_2, %c0_3] : memref<1x1024x196xf32, #tpu.memory_space<vmem>>, vector<1x1024x196xf32>
    %2 = vector.shape_cast %1 : vector<1x1024x196xf32> to vector<1024x196xf32>
    %cst = arith.constant dense<0.000000e+00> : vector<128x196xf32>
    %3 = tpu.matmul %0, %2, %cst {dimension_numbers = #tpu.dot_dimension_numbers<[1], [0], [0], [1], [0, 0, 1, 1], [], []>} : vector<128x1024xf32>, vector<1024x196xf32>, vector<128x196xf32> -> vector<128x196xf32>
    %c0_4 = arith.constant 0 : index
    %c0_5 = arith.constant 0 : index
    %c0_6 = arith.constant 0 : index
    %4 = vector.load %arg4[%c0_4, %c0_5, %c0_6] : memref<1x128x196xf32, #tpu.memory_space<vmem>>, vector<1x128x196xf32>
    %5 = vector.shape_cast %4 : vector<1x128x196xf32> to vector<128x196xf32>
    %6 = vector.shape_cast %3 : vector<128x196xf32> to vector<1x128x196xf32>
    tpu.vector_store %arg4[%c0_4, %c0_5, %c0_6], %6 {strides = array<i32>} : memref<1x128x196xf32, #tpu.memory_space<vmem>>, vector<1x128x196xf32>,
    return
  }
  func.func @transform_0(%arg0: i32, %arg1: i32) -> (i32, i32) {
    %c0_i32 = arith.constant 0 : i32
    %c0_i32_0 = arith.constant 0 : i32
    return %arg1, %c0_i32 : i32, i32
  }
  func.func @transform_1(%arg0: i32, %arg1: i32) -> (i32, i32, i32) {
    %c0_i32 = arith.constant 0 : i32
    %c0_i32_0 = arith.constant 0 : i32
    %c0_i32_1 = arith.constant 0 : i32
    return %arg0, %c0_i32, %c0_i32_0 : i32, i32, i32
  }
  func.func @transform_2(%arg0: i32, %arg1: i32) -> (i32, i32, i32) {
    %c0_i32 = arith.constant 0 : i32
    %c0_i32_0 = arith.constant 0 : i32
    return %arg0, %arg1, %c0_i32 : i32, i32, i32
  }
}

</mosaic_0001>

<llo_original>
// kernel: tpu_custom_call.1
$region0: #{tpu_custom_call.1}
  #allocation0 [shape = 'u32[]', space=smem, size = 0x4, offset = 0x4, fixed_abs, tag = 'smem constant byte address 0x4 - core index']
  #allocation1 [shape = 'u32[144,128]{1,0:T(1,128)}', space=vmem, size = 0x12000, scoped, tag = 'internal scratch']
  %s0 = inlined_call_operand.vmem [shape: f32[256,1024], index: 0, kind: input, shape index: {}]
  %s1 = inlined_call_operand.vmem [shape: f32[1,1024,196], index: 1, kind: input, shape index: {}]
  %s2 = inlined_call_operand.vmem [shape: f32[1,256,196], index: 2, kind: output, shape index: {}]
  %s3 = sld [smem:[#allocation0]]
  $region41: #{tpu_custom_call.1} parent=0
    _
  %s5 = ssub.s32 1, %s3
  %s6 = scalar_select 0, %s5, %s3
  loop: start=0, step=1, limit=4
  $region2: #{tpu_custom_call.1} parent=0 // loop_pre_header
    _
  $region3: #{tpu_custom_call.1} parent=0 // loop_header
    %s8 = sphi 0, %s12
    %p9 = scmp.ge.s32.totalorder %s8, 4
    %s15 = sphi 0, %s27
    %s16 = sphi 0, %s23
    %s17 = sphi 0, %s15
    %s18 = sphi 0, %s16
    %s19 = sphi 0, %s17
    %s20 = sphi 0, %s18
    %s30 = sphi 0, %s32
    %s33 = sphi 0, %s30
    %s34 = sphi 0, %s33
    %s50 = sphi 0, %s34
    %s56 = sphi 0, %s58
    %s59 = sphi 0, %s56
    %s60 = sphi 0, %s59
    %s76 = sphi 0, %s60
    %s84 = sphi 0, %s86
    %s87 = sphi 0, %s84
    %s88 = sphi 0, %s87
    %s104 = sphi 0, %s88
  $region4: #{tpu_custom_call.1} parent=0 // loop_header_branch
    %11 = sbr.rel (%p9) target = $region8
  $region5: #{tpu_custom_call.1} parent=0 // loop_body
    %s13 = ssub.s32 %s8, 1
    %s14 = ssub.s32 %s8, 2
    %s21 = sadd.s32 1, %s16
    %p22 = scmp.ge.s32.totalorder %s21, 2
    %s23 = scalar_select %p22, 0, %s21
    %s24 = sadd.s32 1, %s15
    %s25 = scalar_select %p22, %s24, %s15
    %p26 = scmp.ge.s32.totalorder %s25, 1
    %s27 = scalar_select %p26, 0, %s25
    %s28 = ssub.s32 %s16, %s23
    %p29 = scmp.eq.s32.totalorder %s28, 0
    %s31 = sadd.s32 %s30, 1
    %s32 = scalar_select %p29, %s30, %s31
    %p35 = pneg %p29
    %p36 = scmp.eq.s32.totalorder %s8, 1
    %p37 = por %p35, %p36
    %p38 = scmp.ne.s32.totalorder %s30, %s33
    %p39 = scmp.eq.s32.totalorder %s8, 0
    %p40 = por %p38, %p39
    %p41 = scmp.ne.s32.totalorder %s30, %s33
    %p42 = scmp.eq.s32.totalorder %s13, 1
    %p43 = por %p41, %p42
    %p44 = scmp.ne.s32.totalorder %s33, %s34
    %p45 = scmp.eq.s32.totalorder %s13, 0
    %p46 = por %p44, %p45
    %p47 = scmp.ne.s32.totalorder %s33, %s34
    %p48 = scmp.eq.s32.totalorder %s14, 1
    %p49 = por %p47, %p48
    %p51 = scmp.ne.s32.totalorder %s34, %s50
    %p52 = scmp.eq.s32.totalorder %s14, 0
    %p53 = por %p51, %p52
    %s54 = ssub.s32 %s15, %s27
    %p55 = scmp.eq.s32.totalorder %s54, 0
    %s57 = sadd.s32 %s56, 1
    %s58 = scalar_select %p55, %s56, %s57
    %p61 = pneg %p55
    %p62 = scmp.eq.s32.totalorder %s8, 1
    %p63 = por %p61, %p62
    %p64 = scmp.ne.s32.totalorder %s56, %s59
    %p65 = scmp.eq.s32.totalorder %s8, 0
    %p66 = por %p64, %p65
    %p67 = scmp.ne.s32.totalorder %s56, %s59
    %p68 = scmp.eq.s32.totalorder %s13, 1
    %p69 = por %p67, %p68
    %p70 = scmp.ne.s32.totalorder %s59, %s60
    %p71 = scmp.eq.s32.totalorder %s13, 0
    %p72 = por %p70, %p71
    %p73 = scmp.ne.s32.totalorder %s59, %s60
    %p74 = scmp.eq.s32.totalorder %s14, 1
    %p75 = por %p73, %p74
    %p77 = scmp.ne.s32.totalorder %s60, %s76
    %p78 = scmp.eq.s32.totalorder %s14, 0
    %p79 = por %p77, %p78
    %s80 = ssub.s32 %s15, %s27
    %s81 = ssub.s32 %s16, %s23
    %s82 = sor.u32 %s80, %s81
    %p83 = scmp.eq.s32.totalorder %s82, 0
    %s85 = sadd.s32 %s84, 1
    %s86 = scalar_select %p83, %s84, %s85
    %p89 = pneg %p83
    %p90 = scmp.eq.s32.totalorder %s8, 1
    %p91 = por %p89, %p90
    %p92 = scmp.ne.s32.totalorder %s84, %s87
    %p93 = scmp.eq.s32.totalorder %s8, 0
    %p94 = por %p92, %p93
    %p95 = scmp.ne.s32.totalorder %s84, %s87
    %p96 = scmp.eq.s32.totalorder %s13, 1
    %p97 = por %p95, %p96
    %p98 = scmp.ne.s32.totalorder %s87, %s88
    %p99 = scmp.eq.s32.totalorder %s13, 0
    %p100 = por %p98, %p99
    %p101 = scmp.ne.s32.totalorder %s87, %s88
    %p102 = scmp.eq.s32.totalorder %s14, 1
    %p103 = por %p101, %p102
    %p105 = scmp.ne.s32.totalorder %s88, %s104
    %p106 = scmp.eq.s32.totalorder %s14, 0
    %p107 = por %p105, %p106
    %p108 = scmp.le.s32.totalorder 1, %s8
    %p109 = scmp.lt.s32.totalorder %s8, 3
    %p110 = pnand %p108, %p109
    %p111 = pneg %p110
    // Predicated region
    $region9: #{tpu_custom_call.1} parent=5 // pred_check
      _
    $region10: #{tpu_custom_call.1} parent=5 // pred_check_branch
      %113 = sbr.rel (%p110) target = $region12
    $region11: #{tpu_custom_call.1} parent=5 // pred_region
      %s114 = ssub.s32 %s8, 1
      // Predicated region
      $region13: #{tpu_custom_call.1} parent=11 // pred_check
        %p115 = pneg %p72
      $region14: #{tpu_custom_call.1} parent=11 // pred_check_branch
        %117 = sbr.rel (%p115) target = $region16
      $region15: #{tpu_custom_call.1} parent=11 // pred_region
        %p118 = scmp.lt.s32.totalorder %s17, 0
        %s119 = scalar_select %p118, %s17, 0
        %s120 = smul.addr %s119, 256
        %s121 = smul.addr %s120, 8
        %s122 = scalar_lea.vmem %s1, %s121
      $region16: #{tpu_custom_call.1} parent=11 // pred_fallthru
        _
    $region12: #{tpu_custom_call.1} parent=5 // pred_fallthru
      _
    %p123 = scmp.lt.s32.totalorder %s8, 2
    // Predicated region
    $region17: #{tpu_custom_call.1} parent=5 // pred_check
      %p124 = pneg %p123
    $region18: #{tpu_custom_call.1} parent=5 // pred_check_branch
      %126 = sbr.rel (%p124) target = $region20
    $region19: #{tpu_custom_call.1} parent=5 // pred_region
      // Predicated region
      $region21: #{tpu_custom_call.1} parent=19 // pred_check
        %p127 = pneg %p40
      $region22: #{tpu_custom_call.1} parent=19 // pred_check_branch
        %129 = sbr.rel (%p127) target = $region24
      $region23: #{tpu_custom_call.1} parent=19 // pred_region
        %s130 = smul.u32 16, %s16
        %p131 = scmp.lt.s32.totalorder %s130, 31
        %s132 = scalar_select %p131, %s130, 31
        %s133 = smul.addr %s132, 8
        %s134 = smul.addr %s133, 8
        %s135 = scalar_lea.vmem %s0, %s134
        %s136 = smul.u32 16, %s16
      $region24: #{tpu_custom_call.1} parent=19 // pred_fallthru
        _
    $region20: #{tpu_custom_call.1} parent=5 // pred_fallthru
      _
    %p137 = scmp.le.s32.totalorder 1, %s8
    %p138 = scmp.lt.s32.totalorder %s8, 3
    %p139 = pnand %p137, %p138
    %p140 = pneg %p139
    // Predicated region
    $region25: #{tpu_custom_call.1} parent=5 // pred_check
      _
    $region26: #{tpu_custom_call.1} parent=5 // pred_check_branch
      %142 = sbr.rel (%p139) target = $region28
    $region27: #{tpu_custom_call.1} parent=5 // pred_region
      %s143 = ssub.s32 %s8, 1
      %s144 = smul.u32 16, %s18
      %p145 = scmp.lt.s32.totalorder %s144, 31
      %s146 = scalar_select %p145, %s144, 31
      %s147 = smul.addr %s146, 8
      %s148 = smul.addr %s147, 8
      %s149 = scalar_lea.vmem %s0, %s148
      %p150 = pneg %p46
      %p151 = pneg %p43
      %p152 = scmp.lt.s32.totalorder %s17, 0
      %s153 = scalar_select %p152, %s17, 0
      %s154 = smul.addr %s153, 256
      %s155 = smul.addr %s154, 8
      %s156 = scalar_lea.vmem %s1, %s155
      %p157 = pneg %p72
      %p158 = pneg %p69
      %p159 = pneg %p100
      %p160 = pneg %p97
      %s161 = smul.u32 16, %s18
      %p162 = scmp.lt.s32.totalorder %s17, 0
      %s163 = scalar_select %p162, %s17, 0
      %p164 = scmp.lt.s32.totalorder %s161, 31
      %s165 = scalar_select %p164, %s161, 31
      %s166 = smul.addr %s165, 2
      %s167 = smul.addr %s163, 64
      %s168 = sadd.s32 %s166, %s167
      %s169 = smul.addr %s168, 8
      %s170 = scalar_lea.vmem %s2, %s169
      %s171 = smul.u32 16, %s18
      %p172 = scmp.lt.s32.totalorder %s171, 31
      %s173 = scalar_select %p172, %s171, 31
      %s174 = smul.addr %s173, 8
      %s175 = smul.addr %s174, 8
      %s176 = scalar_lea.vmem %s0, %s175
      %s177 = smul.u32 16, %s18
      %p178 = scmp.lt.s32.totalorder %s17, 0
      %s179 = scalar_select %p178, %s17, 0
      %s180 = smul.addr %s179, 256
      %s181 = smul.addr %s180, 8
      %s182 = scalar_lea.vmem %s1, %s181
      %s183 = smul.u32 16, %s18
      %p184 = scmp.lt.s32.totalorder %s17, 0
      %s185 = scalar_select %p184, %s17, 0
      %p186 = scmp.lt.s32.totalorder %s183, 31
      %s187 = scalar_select %p186, %s183, 31
      %s188 = smul.addr %s187, 2
      %s189 = smul.addr %s185, 64
      %s190 = sadd.s32 %s188, %s189
      %s191 = smul.addr %s190, 8
      %s192 = scalar_lea.vmem %s2, %s191
      %s193 = smul.u32 16, %s18
      %v194 = vld [vmem:[%s176] sm:$0xff]
      %v195 = vld [vmem:[%s176 + $0x8] sm:$0xff]
      %v196 = vld [vmem:[%s176 + $0x10] sm:$0xff]
      %v197 = vld [vmem:[%s176 + $0x18] sm:$0xff]
      %v198 = vld [vmem:[%s176 + $0x20] sm:$0xff]
      %v199 = vld [vmem:[%s176 + $0x28] sm:$0xff]
      %v200 = vld [vmem:[%s176 + $0x30] sm:$0xff]
      %v201 = vld [vmem:[%s176 + $0x38] sm:$0xff]
      %v202 = vld [vmem:[%s176 + $0x40] sm:$0xff]
      %v203 = vld [vmem:[%s176 + $0x48] sm:$0xff]
      %v204 = vld [vmem:[%s176 + $0x50] sm:$0xff]
      %v205 = vld [vmem:[%s176 + $0x58] sm:$0xff]
      %v206 = vld [vmem:[%s176 + $0x60] sm:$0xff]
      %v207 = vld [vmem:[%s176 + $0x68] sm:$0xff]
      %v208 = vld [vmem:[%s176 + $0x70] sm:$0xff]
      %v209 = vld [vmem:[%s176 + $0x78] sm:$0xff]
      %v210 = vld [vmem:[%s176 + $0x80] sm:$0xff]
      %v211 = vld [vmem:[%s176 + $0x88] sm:$0xff]
      %v212 = vld [vmem:[%s176 + $0x90] sm:$0xff]
      %v213 = vld [vmem:[%s176 + $0x98] sm:$0xff]
      %v214 = vld [vmem:[%s176 + $0xa0] sm:$0xff]
      %v215 = vld [vmem:[%s176 + $0xa8] sm:$0xff]
      %v216 = vld [vmem:[%s176 + $0xb0] sm:$0xff]
      %v217 = vld [vmem:[%s176 + $0xb8] sm:$0xff]
      %v218 = vld [vmem:[%s176 + $0xc0] sm:$0xff]
      %v219 = vld [vmem:[%s176 + $0xc8] sm:$0xff]
      %v220 = vld [vmem:[%s176 + $0xd0] sm:$0xff]
      %v221 = vld [vmem:[%s176 + $0xd8] sm:$0xff]
      %v222 = vld [vmem:[%s176 + $0xe0] sm:$0xff]
      %v223 = vld [vmem:[%s176 + $0xe8] sm:$0xff]
      %v224 = vld [vmem:[%s176 + $0xf0] sm:$0xff]
      %v225 = vld [vmem:[%s176 + $0xf8] sm:$0xff]
      %v226 = vld [vmem:[%s176 + $0x100] sm:$0xff]
      %v227 = vld [vmem:[%s176 + $0x108] sm:$0xff]
      %v228 = vld [vmem:[%s176 + $0x110] sm:$0xff]
      %v229 = vld [vmem:[%s176 + $0x118] sm:$0xff]
      %v230 = vld [vmem:[%s176 + $0x120] sm:$0xff]
      %v231 = vld [vmem:[%s176 + $0x128] sm:$0xff]
      %v232 = vld [vmem:[%s176 + $0x130] sm:$0xff]
      %v233 = vld [vmem:[%s176 + $0x138] sm:$0xff]
      %v234 = vld [vmem:[%s176 + $0x140] sm:$0xff]
      %v235 = vld [vmem:[%s176 + $0x148] sm:$0xff]
      %v236 = vld [vmem:[%s176 + $0x150] sm:$0xff]
      %v237 = vld [vmem:[%s176 + $0x158] sm:$0xff]
      %v238 = vld [vmem:[%s176 + $0x160] sm:$0xff]
      %v239 = vld [vmem:[%s176 + $0x168] sm:$0xff]
      %v240 = vld [vmem:[%s176 + $0x170] sm:$0xff]
      %v241 = vld [vmem:[%s176 + $0x178] sm:$0xff]
      %v242 = vld [vmem:[%s176 + $0x180] sm:$0xff]
      %v243 = vld [vmem:[%s176 + $0x188] sm:$0xff]
      %v244 = vld [vmem:[%s176 + $0x190] sm:$0xff]
      %v245 = vld [vmem:[%s176 + $0x198] sm:$0xff]
      %v246 = vld [vmem:[%s176 + $0x1a0] sm:$0xff]
      %v247 = vld [vmem:[%s176 + $0x1a8] sm:$0xff]
      %v248 = vld [vmem:[%s176 + $0x1b0] sm:$0xff]
      %v249 = vld [vmem:[%s176 + $0x1b8] sm:$0xff]
      %v250 = vld [vmem:[%s176 + $0x1c0] sm:$0xff]
      %v251 = vld [vmem:[%s176 + $0x1c8] sm:$0xff]
      %v252 = vld [vmem:[%s176 + $0x1d0] sm:$0xff]
      %v253 = vld [vmem:[%s176 + $0x1d8] sm:$0xff]
      %v254 = vld [vmem:[%s176 + $0x1e0] sm:$0xff]
      %v255 = vld [vmem:[%s176 + $0x1e8] sm:$0xff]
      %v256 = vld [vmem:[%s176 + $0x1f0] sm:$0xff]
      %v257 = vld [vmem:[%s176 + $0x1f8] sm:$0xff]
      %v258 = vld [vmem:[%s176 + $0x200] sm:$0xff]
      %v259 = vld [vmem:[%s176 + $0x208] sm:$0xff]
      %v260 = vld [vmem:[%s176 + $0x210] sm:$0xff]
      %v261 = vld [vmem:[%s176 + $0x218] sm:$0xff]
      %v262 = vld [vmem:[%s176 + $0x220] sm:$0xff]
      %v263 = vld [vmem:[%s176 + $0x228] sm:$0xff]
      %v264 = vld [vmem:[%s176 + $0x230] sm:$0xff]
      %v265 = vld [vmem:[%s176 + $0x238] sm:$0xff]
      %v266 = vld [vmem:[%s176 + $0x240] sm:$0xff]
      %v267 = vld [vmem:[%s176 + $0x248] sm:$0xff]
      %v268 = vld [vmem:[%s176 + $0x250] sm:$0xff]
      %v269 = vld [vmem:[%s176 + $0x258] sm:$0xff]
      %v270 = vld [vmem:[%s176 + $0x260] sm:$0xff]
      %v271 = vld [vmem:[%s176 + $0x268] sm:$0xff]
      %v272 = vld [vmem:[%s176 + $0x270] sm:$0xff]
      %v273 = vld [vmem:[%s176 + $0x278] sm:$0xff]
      %v274 = vld [vmem:[%s176 + $0x280] sm:$0xff]
      %v275 = vld [vmem:[%s176 + $0x288] sm:$0xff]
      %v276 = vld [vmem:[%s176 + $0x290] sm:$0xff]
      %v277 = vld [vmem:[%s176 + $0x298] sm:$0xff]
      %v278 = vld [vmem:[%s176 + $0x2a0] sm:$0xff]
      %v279 = vld [vmem:[%s176 + $0x2a8] sm:$0xff]
      %v280 = vld [vmem:[%s176 + $0x2b0] sm:$0xff]
      %v281 = vld [vmem:[%s176 + $0x2b8] sm:$0xff]
      %v282 = vld [vmem:[%s176 + $0x2c0] sm:$0xff]
      %v283 = vld [vmem:[%s176 + $0x2c8] sm:$0xff]
      %v284 = vld [vmem:[%s176 + $0x2d0] sm:$0xff]
      %v285 = vld [vmem:[%s176 + $0x2d8] sm:$0xff]
      %v286 = vld [vmem:[%s176 + $0x2e0] sm:$0xff]
      %v287 = vld [vmem:[%s176 + $0x2e8] sm:$0xff]
      %v288 = vld [vmem:[%s176 + $0x2f0] sm:$0xff]
      %v289 = vld [vmem:[%s176 + $0x2f8] sm:$0xff]
      %v290 = vld [vmem:[%s176 + $0x300] sm:$0xff]
      %v291 = vld [vmem:[%s176 + $0x308] sm:$0xff]
      %v292 = vld [vmem:[%s176 + $0x310] sm:$0xff]
      %v293 = vld [vmem:[%s176 + $0x318] sm:$0xff]
      %v294 = vld [vmem:[%s176 + $0x320] sm:$0xff]
      %v295 = vld [vmem:[%s176 + $0x328] sm:$0xff]
      %v296 = vld [vmem:[%s176 + $0x330] sm:$0xff]
      %v297 = vld [vmem:[%s176 + $0x338] sm:$0xff]
      %v298 = vld [vmem:[%s176 + $0x340] sm:$0xff]
      %v299 = vld [vmem:[%s176 + $0x348] sm:$0xff]
      %v300 = vld [vmem:[%s176 + $0x350] sm:$0xff]
      %v301 = vld [vmem:[%s176 + $0x358] sm:$0xff]
      %v302 = vld [vmem:[%s176 + $0x360] sm:$0xff]
      %v303 = vld [vmem:[%s176 + $0x368] sm:$0xff]
      %v304 = vld [vmem:[%s176 + $0x370] sm:$0xff]
      %v305 = vld [vmem:[%s176 + $0x378] sm:$0xff]
      %v306 = vld [vmem:[%s176 + $0x380] sm:$0xff]
      %v307 = vld [vmem:[%s176 + $0x388] sm:$0xff]
      %v308 = vld [vmem:[%s176 + $0x390] sm:$0xff]
      %v309 = vld [vmem:[%s176 + $0x398] sm:$0xff]
      %v310 = vld [vmem:[%s176 + $0x3a0] sm:$0xff]
      %v311 = vld [vmem:[%s176 + $0x3a8] sm:$0xff]
      %v312 = vld [vmem:[%s176 + $0x3b0] sm:$0xff]
      %v313 = vld [vmem:[%s176 + $0x3b8] sm:$0xff]
      %v314 = vld [vmem:[%s176 + $0x3c0] sm:$0xff]
      %v315 = vld [vmem:[%s176 + $0x3c8] sm:$0xff]
      %v316 = vld [vmem:[%s176 + $0x3d0] sm:$0xff]
      %v317 = vld [vmem:[%s176 + $0x3d8] sm:$0xff]
      %v318 = vld [vmem:[%s176 + $0x3e0] sm:$0xff]
      %v319 = vld [vmem:[%s176 + $0x3e8] sm:$0xff]
      %v320 = vld [vmem:[%s176 + $0x3f0] sm:$0xff]
      %v321 = vld [vmem:[%s176 + $0x3f8] sm:$0xff]
      %v322 = vld [vmem:[%s182] sm:$0xff]
      %v323 = vld [vmem:[%s182 + $0x8] sm:$0xff]
      %v324 = vld [vmem:[%s182 + $0x10] sm:$0xff]
      %v325 = vld [vmem:[%s182 + $0x18] sm:$0xff]
      %v326 = vld [vmem:[%s182 + $0x20] sm:$0xff]
      %v327 = vld [vmem:[%s182 + $0x28] sm:$0xff]
      %v328 = vld [vmem:[%s182 + $0x30] sm:$0xff]
      %v329 = vld [vmem:[%s182 + $0x38] sm:$0xff]
      %v330 = vld [vmem:[%s182 + $0x40] sm:$0xff]
      %v331 = vld [vmem:[%s182 + $0x48] sm:$0xff]
      %v332 = vld [vmem:[%s182 + $0x50] sm:$0xff]
      %v333 = vld [vmem:[%s182 + $0x58] sm:$0xff]
      %v334 = vld [vmem:[%s182 + $0x60] sm:$0xff]
      %v335 = vld [vmem:[%s182 + $0x68] sm:$0xff]
      %v336 = vld [vmem:[%s182 + $0x70] sm:$0xff]
      %v337 = vld [vmem:[%s182 + $0x78] sm:$0xff]
      %v338 = vld [vmem:[%s182 + $0x80] sm:$0xff]
      %v339 = vld [vmem:[%s182 + $0x88] sm:$0xff]
      %v340 = vld [vmem:[%s182 + $0x90] sm:$0xff]
      %v341 = vld [vmem:[%s182 + $0x98] sm:$0xff]
      %v342 = vld [vmem:[%s182 + $0xa0] sm:$0xff]
      %v343 = vld [vmem:[%s182 + $0xa8] sm:$0xff]
      %v344 = vld [vmem:[%s182 + $0xb0] sm:$0xff]
      %v345 = vld [vmem:[%s182 + $0xb8] sm:$0xff]
      %v346 = vld [vmem:[%s182 + $0xc0] sm:$0xff]
      %v347 = vld [vmem:[%s182 + $0xc8] sm:$0xff]
      %v348 = vld [vmem:[%s182 + $0xd0] sm:$0xff]
      %v349 = vld [vmem:[%s182 + $0xd8] sm:$0xff]
      %v350 = vld [vmem:[%s182 + $0xe0] sm:$0xff]
      %v351 = vld [vmem:[%s182 + $0xe8] sm:$0xff]
      %v352 = vld [vmem:[%s182 + $0xf0] sm:$0xff]
      %v353 = vld [vmem:[%s182 + $0xf8] sm:$0xff]
      %v354 = vld [vmem:[%s182 + $0x100] sm:$0xff]
      %v355 = vld [vmem:[%s182 + $0x108] sm:$0xff]
      %v356 = vld [vmem:[%s182 + $0x110] sm:$0xff]
      %v357 = vld [vmem:[%s182 + $0x118] sm:$0xff]
      %v358 = vld [vmem:[%s182 + $0x120] sm:$0xff]
      %v359 = vld [vmem:[%s182 + $0x128] sm:$0xff]
      %v360 = vld [vmem:[%s182 + $0x130] sm:$0xff]
      %v361 = vld [vmem:[%s182 + $0x138] sm:$0xff]
      %v362 = vld [vmem:[%s182 + $0x140] sm:$0xff]
      %v363 = vld [vmem:[%s182 + $0x148] sm:$0xff]
      %v364 = vld [vmem:[%s182 + $0x150] sm:$0xff]
      %v365 = vld [vmem:[%s182 + $0x158] sm:$0xff]
      %v366 = vld [vmem:[%s182 + $0x160] sm:$0xff]
      %v367 = vld [vmem:[%s182 + $0x168] sm:$0xff]
      %v368 = vld [vmem:[%s182 + $0x170] sm:$0xff]
      %v369 = vld [vmem:[%s182 + $0x178] sm:$0xff]
      %v370 = vld [vmem:[%s182 + $0x180] sm:$0xff]
      %v371 = vld [vmem:[%s182 + $0x188] sm:$0xff]
      %v372 = vld [vmem:[%s182 + $0x190] sm:$0xff]
      %v373 = vld [vmem:[%s182 + $0x198] sm:$0xff]
      %v374 = vld [vmem:[%s182 + $0x1a0] sm:$0xff]
      %v375 = vld [vmem:[%s182 + $0x1a8] sm:$0xff]
      %v376 = vld [vmem:[%s182 + $0x1b0] sm:$0xff]
      %v377 = vld [vmem:[%s182 + $0x1b8] sm:$0xff]
      %v378 = vld [vmem:[%s182 + $0x1c0] sm:$0xff]
      %v379 = vld [vmem:[%s182 + $0x1c8] sm:$0xff]
      %v380 = vld [vmem:[%s182 + $0x1d0] sm:$0xff]
      %v381 = vld [vmem:[%s182 + $0x1d8] sm:$0xff]
      %v382 = vld [vmem:[%s182 + $0x1e0] sm:$0xff]
      %v383 = vld [vmem:[%s182 + $0x1e8] sm:$0xff]
      %v384 = vld [vmem:[%s182 + $0x1f0] sm:$0xff]
      %v385 = vld [vmem:[%s182 + $0x1f8] sm:$0xff]
      %v386 = vld [vmem:[%s182 + $0x200] sm:$0xff]
      %v387 = vld [vmem:[%s182 + $0x208] sm:$0xff]
      %v388 = vld [vmem:[%s182 + $0x210] sm:$0xff]
      %v389 = vld [vmem:[%s182 + $0x218] sm:$0xff]
      %v390 = vld [vmem:[%s182 + $0x220] sm:$0xff]
      %v391 = vld [vmem:[%s182 + $0x228] sm:$0xff]
      %v392 = vld [vmem:[%s182 + $0x230] sm:$0xff]
      %v393 = vld [vmem:[%s182 + $0x238] sm:$0xff]
      %v394 = vld [vmem:[%s182 + $0x240] sm:$0xff]
      %v395 = vld [vmem:[%s182 + $0x248] sm:$0xff]
      %v396 = vld [vmem:[%s182 + $0x250] sm:$0xff]
      %v397 = vld [vmem:[%s182 + $0x258] sm:$0xff]
      %v398 = vld [vmem:[%s182 + $0x260] sm:$0xff]
      %v399 = vld [vmem:[%s182 + $0x268] sm:$0xff]
      %v400 = vld [vmem:[%s182 + $0x270] sm:$0xff]
      %v401 = vld [vmem:[%s182 + $0x278] sm:$0xff]
      %v402 = vld [vmem:[%s182 + $0x280] sm:$0xff]
      %v403 = vld [vmem:[%s182 + $0x288] sm:$0xff]
      %v404 = vld [vmem:[%s182 + $0x290] sm:$0xff]
      %v405 = vld [vmem:[%s182 + $0x298] sm:$0xff]
      %v406 = vld [vmem:[%s182 + $0x2a0] sm:$0xff]
      %v407 = vld [vmem:[%s182 + $0x2a8] sm:$0xff]
      %v408 = vld [vmem:[%s182 + $0x2b0] sm:$0xff]
      %v409 = vld [vmem:[%s182 + $0x2b8] sm:$0xff]
      %v410 = vld [vmem:[%s182 + $0x2c0] sm:$0xff]
      %v411 = vld [vmem:[%s182 + $0x2c8] sm:$0xff]
      %v412 = vld [vmem:[%s182 + $0x2d0] sm:$0xff]
      %v413 = vld [vmem:[%s182 + $0x2d8] sm:$0xff]
      %v414 = vld [vmem:[%s182 + $0x2e0] sm:$0xff]
      %v415 = vld [vmem:[%s182 + $0x2e8] sm:$0xff]
      %v416 = vld [vmem:[%s182 + $0x2f0] sm:$0xff]
      %v417 = vld [vmem:[%s182 + $0x2f8] sm:$0xff]
      %v418 = vld [vmem:[%s182 + $0x300] sm:$0xff]
      %v419 = vld [vmem:[%s182 + $0x308] sm:$0xff]
      %v420 = vld [vmem:[%s182 + $0x310] sm:$0xff]
      %v421 = vld [vmem:[%s182 + $0x318] sm:$0xff]
      %v422 = vld [vmem:[%s182 + $0x320] sm:$0xff]
      %v423 = vld [vmem:[%s182 + $0x328] sm:$0xff]
      %v424 = vld [vmem:[%s182 + $0x330] sm:$0xff]
      %v425 = vld [vmem:[%s182 + $0x338] sm:$0xff]
      %v426 = vld [vmem:[%s182 + $0x340] sm:$0xff]
      %v427 = vld [vmem:[%s182 + $0x348] sm:$0xff]
      %v428 = vld [vmem:[%s182 + $0x350] sm:$0xff]
      %v429 = vld [vmem:[%s182 + $0x358] sm:$0xff]
      %v430 = vld [vmem:[%s182 + $0x360] sm:$0xff]
      %v431 = vld [vmem:[%s182 + $0x368] sm:$0xff]
      %v432 = vld [vmem:[%s182 + $0x370] sm:$0xff]
      %v433 = vld [vmem:[%s182 + $0x378] sm:$0xff]
      %v434 = vld [vmem:[%s182 + $0x380] sm:$0xff]
      %v435 = vld [vmem:[%s182 + $0x388] sm:$0xff]
      %v436 = vld [vmem:[%s182 + $0x390] sm:$0xff]
      %v437 = vld [vmem:[%s182 + $0x398] sm:$0xff]
      %v438 = vld [vmem:[%s182 + $0x3a0] sm:$0xff]
      %v439 = vld [vmem:[%s182 + $0x3a8] sm:$0xff]
      %v440 = vld [vmem:[%s182 + $0x3b0] sm:$0xff]
      %v441 = vld [vmem:[%s182 + $0x3b8] sm:$0xff]
      %v442 = vld [vmem:[%s182 + $0x3c0] sm:$0xff]
      %v443 = vld [vmem:[%s182 + $0x3c8] sm:$0xff]
      %v444 = vld [vmem:[%s182 + $0x3d0] sm:$0xff]
      %v445 = vld [vmem:[%s182 + $0x3d8] sm:$0xff]
      %v446 = vld [vmem:[%s182 + $0x3e0] sm:$0xff]
      %v447 = vld [vmem:[%s182 + $0x3e8] sm:$0xff]
      %v448 = vld [vmem:[%s182 + $0x3f0] sm:$0xff]
      %v449 = vld [vmem:[%s182 + $0x3f8] sm:$0xff]
      %v450 = vld [vmem:[%s182 + $0x400] sm:$0xff]
      %v451 = vld [vmem:[%s182 + $0x408] sm:$0xff]
      %v452 = vld [vmem:[%s182 + $0x410] sm:$0xff]
      %v453 = vld [vmem:[%s182 + $0x418] sm:$0xff]
      %v454 = vld [vmem:[%s182 + $0x420] sm:$0xff]
      %v455 = vld [vmem:[%s182 + $0x428] sm:$0xff]
      %v456 = vld [vmem:[%s182 + $0x430] sm:$0xff]
      %v457 = vld [vmem:[%s182 + $0x438] sm:$0xff]
      %v458 = vld [vmem:[%s182 + $0x440] sm:$0xff]
      %v459 = vld [vmem:[%s182 + $0x448] sm:$0xff]
      %v460 = vld [vmem:[%s182 + $0x450] sm:$0xff]
      %v461 = vld [vmem:[%s182 + $0x458] sm:$0xff]
      %v462 = vld [vmem:[%s182 + $0x460] sm:$0xff]
      %v463 = vld [vmem:[%s182 + $0x468] sm:$0xff]
      %v464 = vld [vmem:[%s182 + $0x470] sm:$0xff]
      %v465 = vld [vmem:[%s182 + $0x478] sm:$0xff]
      %v466 = vld [vmem:[%s182 + $0x480] sm:$0xff]
      %v467 = vld [vmem:[%s182 + $0x488] sm:$0xff]
      %v468 = vld [vmem:[%s182 + $0x490] sm:$0xff]
      %v469 = vld [vmem:[%s182 + $0x498] sm:$0xff]
      %v470 = vld [vmem:[%s182 + $0x4a0] sm:$0xff]
      %v471 = vld [vmem:[%s182 + $0x4a8] sm:$0xff]
      %v472 = vld [vmem:[%s182 + $0x4b0] sm:$0xff]
      %v473 = vld [vmem:[%s182 + $0x4b8] sm:$0xff]
      %v474 = vld [vmem:[%s182 + $0x4c0] sm:$0xff]
      %v475 = vld [vmem:[%s182 + $0x4c8] sm:$0xff]
      %v476 = vld [vmem:[%s182 + $0x4d0] sm:$0xff]
      %v477 = vld [vmem:[%s182 + $0x4d8] sm:$0xff]
      %v478 = vld [vmem:[%s182 + $0x4e0] sm:$0xff]
      %v479 = vld [vmem:[%s182 + $0x4e8] sm:$0xff]
      %v480 = vld [vmem:[%s182 + $0x4f0] sm:$0xff]
      %v481 = vld [vmem:[%s182 + $0x4f8] sm:$0xff]
      %v482 = vld [vmem:[%s182 + $0x500] sm:$0xff]
      %v483 = vld [vmem:[%s182 + $0x508] sm:$0xff]
      %v484 = vld [vmem:[%s182 + $0x510] sm:$0xff]
      %v485 = vld [vmem:[%s182 + $0x518] sm:$0xff]
      %v486 = vld [vmem:[%s182 + $0x520] sm:$0xff]
      %v487 = vld [vmem:[%s182 + $0x528] sm:$0xff]
      %v488 = vld [vmem:[%s182 + $0x530] sm:$0xff]
      %v489 = vld [vmem:[%s182 + $0x538] sm:$0xff]
      %v490 = vld [vmem:[%s182 + $0x540] sm:$0xff]
      %v491 = vld [vmem:[%s182 + $0x548] sm:$0xff]
      %v492 = vld [vmem:[%s182 + $0x550] sm:$0xff]
      %v493 = vld [vmem:[%s182 + $0x558] sm:$0xff]
      %v494 = vld [vmem:[%s182 + $0x560] sm:$0xff]
      %v495 = vld [vmem:[%s182 + $0x568] sm:$0xff]
      %v496 = vld [vmem:[%s182 + $0x570] sm:$0xff]
      %v497 = vld [vmem:[%s182 + $0x578] sm:$0xff]
      %v498 = vld [vmem:[%s182 + $0x580] sm:$0xff]
      %v499 = vld [vmem:[%s182 + $0x588] sm:$0xff]
      %v500 = vld [vmem:[%s182 + $0x590] sm:$0xff]
      %v501 = vld [vmem:[%s182 + $0x598] sm:$0xff]
      %v502 = vld [vmem:[%s182 + $0x5a0] sm:$0xff]
      %v503 = vld [vmem:[%s182 + $0x5a8] sm:$0xff]
      %v504 = vld [vmem:[%s182 + $0x5b0] sm:$0xff]
      %v505 = vld [vmem:[%s182 + $0x5b8] sm:$0xff]
      %v506 = vld [vmem:[%s182 + $0x5c0] sm:$0xff]
      %v507 = vld [vmem:[%s182 + $0x5c8] sm:$0xff]
      %v508 = vld [vmem:[%s182 + $0x5d0] sm:$0xff]
      %v509 = vld [vmem:[%s182 + $0x5d8] sm:$0xff]
      %v510 = vld [vmem:[%s182 + $0x5e0] sm:$0xff]
      %v511 = vld [vmem:[%s182 + $0x5e8] sm:$0xff]
      %v512 = vld [vmem:[%s182 + $0x5f0] sm:$0xff]
      %v513 = vld [vmem:[%s182 + $0x5f8] sm:$0xff]
      %v514 = vld [vmem:[%s182 + $0x600] sm:$0xff]
      %v515 = vld [vmem:[%s182 + $0x608] sm:$0xff]
      %v516 = vld [vmem:[%s182 + $0x610] sm:$0xff]
      %v517 = vld [vmem:[%s182 + $0x618] sm:$0xff]
      %v518 = vld [vmem:[%s182 + $0x620] sm:$0xff]
      %v519 = vld [vmem:[%s182 + $0x628] sm:$0xff]
      %v520 = vld [vmem:[%s182 + $0x630] sm:$0xff]
      %v521 = vld [vmem:[%s182 + $0x638] sm:$0xff]
      %v522 = vld [vmem:[%s182 + $0x640] sm:$0xff]
      %v523 = vld [vmem:[%s182 + $0x648] sm:$0xff]
      %v524 = vld [vmem:[%s182 + $0x650] sm:$0xff]
      %v525 = vld [vmem:[%s182 + $0x658] sm:$0xff]
      %v526 = vld [vmem:[%s182 + $0x660] sm:$0xff]
      %v527 = vld [vmem:[%s182 + $0x668] sm:$0xff]
      %v528 = vld [vmem:[%s182 + $0x670] sm:$0xff]
      %v529 = vld [vmem:[%s182 + $0x678] sm:$0xff]
      %v530 = vld [vmem:[%s182 + $0x680] sm:$0xff]
      %v531 = vld [vmem:[%s182 + $0x688] sm:$0xff]
      %v532 = vld [vmem:[%s182 + $0x690] sm:$0xff]
      %v533 = vld [vmem:[%s182 + $0x698] sm:$0xff]
      %v534 = vld [vmem:[%s182 + $0x6a0] sm:$0xff]
      %v535 = vld [vmem:[%s182 + $0x6a8] sm:$0xff]
      %v536 = vld [vmem:[%s182 + $0x6b0] sm:$0xff]
      %v537 = vld [vmem:[%s182 + $0x6b8] sm:$0xff]
      %v538 = vld [vmem:[%s182 + $0x6c0] sm:$0xff]
      %v539 = vld [vmem:[%s182 + $0x6c8] sm:$0xff]
      %v540 = vld [vmem:[%s182 + $0x6d0] sm:$0xff]
      %v541 = vld [vmem:[%s182 + $0x6d8] sm:$0xff]
      %v542 = vld [vmem:[%s182 + $0x6e0] sm:$0xff]
      %v543 = vld [vmem:[%s182 + $0x6e8] sm:$0xff]
      %v544 = vld [vmem:[%s182 + $0x6f0] sm:$0xff]
      %v545 = vld [vmem:[%s182 + $0x6f8] sm:$0xff]
      %v546 = vld [vmem:[%s182 + $0x700] sm:$0xff]
      %v547 = vld [vmem:[%s182 + $0x708] sm:$0xff]
      %v548 = vld [vmem:[%s182 + $0x710] sm:$0xff]
      %v549 = vld [vmem:[%s182 + $0x718] sm:$0xff]
      %v550 = vld [vmem:[%s182 + $0x720] sm:$0xff]
      %v551 = vld [vmem:[%s182 + $0x728] sm:$0xff]
      %v552 = vld [vmem:[%s182 + $0x730] sm:$0xff]
      %v553 = vld [vmem:[%s182 + $0x738] sm:$0xff]
      %v554 = vld [vmem:[%s182 + $0x740] sm:$0xff]
      %v555 = vld [vmem:[%s182 + $0x748] sm:$0xff]
      %v556 = vld [vmem:[%s182 + $0x750] sm:$0xff]
      %v557 = vld [vmem:[%s182 + $0x758] sm:$0xff]
      %v558 = vld [vmem:[%s182 + $0x760] sm:$0xff]
      %v559 = vld [vmem:[%s182 + $0x768] sm:$0xff]
      %v560 = vld [vmem:[%s182 + $0x770] sm:$0xff]
      %v561 = vld [vmem:[%s182 + $0x778] sm:$0xff]
      %v562 = vld [vmem:[%s182 + $0x780] sm:$0xff]
      %v563 = vld [vmem:[%s182 + $0x788] sm:$0xff]
      %v564 = vld [vmem:[%s182 + $0x790] sm:$0xff]
      %v565 = vld [vmem:[%s182 + $0x798] sm:$0xff]
      %v566 = vld [vmem:[%s182 + $0x7a0] sm:$0xff]
      %v567 = vld [vmem:[%s182 + $0x7a8] sm:$0xff]
      %v568 = vld [vmem:[%s182 + $0x7b0] sm:$0xff]
      %v569 = vld [vmem:[%s182 + $0x7b8] sm:$0xff]
      %v570 = vld [vmem:[%s182 + $0x7c0] sm:$0xff]
      %v571 = vld [vmem:[%s182 + $0x7c8] sm:$0xff]
      %v572 = vld [vmem:[%s182 + $0x7d0] sm:$0xff]
      %v573 = vld [vmem:[%s182 + $0x7d8] sm:$0xff]
      %v574 = vld [vmem:[%s182 + $0x7e0] sm:$0xff]
      %v575 = vld [vmem:[%s182 + $0x7e8] sm:$0xff]
      %v576 = vld [vmem:[%s182 + $0x7f0] sm:$0xff]
      %v577 = vld [vmem:[%s182 + $0x7f8] sm:$0xff]
      %578 = vmatprep.subr.mxu0 %v323
      %579 = vmatpush1.msra.mxu0 %v322
      %580 = vmatprep.subr.mxu0 %v325
      %581 = vmatpush1.msra.mxu0 %v324
      %582 = vmatprep.subr.mxu0 %v327
      %583 = vmatpush1.msra.mxu0 %v326
      %584 = vmatprep.subr.mxu0 %v329
      %585 = vmatpush1.msra.mxu0 %v328
      %586 = vmatprep.subr.mxu0 %v331
      %587 = vmatpush1.msra.mxu0 %v330
      %588 = vmatprep.subr.mxu0 %v333
      %589 = vmatpush1.msra.mxu0 %v332
      %590 = vmatprep.subr.mxu0 %v335
      %591 = vmatpush1.msra.mxu0 %v334
      %592 = vmatprep.subr.mxu0 %v337
      %593 = vmatpush1.msra.mxu0 %v336
      %594 = vmatprep.subr.mxu0 %v339
      %595 = vmatpush1.msra.mxu0 %v338
      %596 = vmatprep.subr.mxu0 %v341
      %597 = vmatpush1.msra.mxu0 %v340
      %598 = vmatprep.subr.mxu0 %v343
      %599 = vmatpush1.msra.mxu0 %v342
      %600 = vmatprep.subr.mxu0 %v345
      %601 = vmatpush1.msra.mxu0 %v344
      %602 = vmatprep.subr.mxu0 %v347
      %603 = vmatpush1.msra.mxu0 %v346
      %604 = vmatprep.subr.mxu0 %v349
      %605 = vmatpush1.msra.mxu0 %v348
      %606 = vmatprep.subr.mxu0 %v351
      %607 = vmatpush1.msra.mxu0 %v350
      %608 = vmatprep.subr.mxu0 %v353
      %609 = vmatpush1.msra.mxu0 %v352
      %610 = vmatprep.subr.mxu0 %v355
      %611 = vmatpush1.msra.mxu0 %v354
      %612 = vmatprep.subr.mxu0 %v357
      %613 = vmatpush1.msra.mxu0 %v356
      %614 = vmatprep.subr.mxu0 %v359
      %615 = vmatpush1.msra.mxu0 %v358
      %616 = vmatprep.subr.mxu0 %v361
      %617 = vmatpush1.msra.mxu0 %v360
      %618 = vmatprep.subr.mxu0 %v363
      %619 = vmatpush1.msra.mxu0 %v362
      %620 = vmatprep.subr.mxu0 %v365
      %621 = vmatpush1.msra.mxu0 %v364
      %622 = vmatprep.subr.mxu0 %v367
      %623 = vmatpush1.msra.mxu0 %v366
      %624 = vmatprep.subr.mxu0 %v369
      %625 = vmatpush1.msra.mxu0 %v368
      %626 = vmatprep.subr.mxu0 %v371
      %627 = vmatpush1.msra.mxu0 %v370
      %628 = vmatprep.subr.mxu0 %v373
      %629 = vmatpush1.msra.mxu0 %v372
      %630 = vmatprep.subr.mxu0 %v375
      %631 = vmatpush1.msra.mxu0 %v374
      %632 = vmatprep.subr.mxu0 %v377
      %633 = vmatpush1.msra.mxu0 %v376
      %634 = vmatprep.subr.mxu0 %v379
      %635 = vmatpush1.msra.mxu0 %v378
      %636 = vmatprep.subr.mxu0 %v381
      %637 = vmatpush1.msra.mxu0 %v380
      %638 = vmatprep.subr.mxu0 %v383
      %639 = vmatpush1.msra.mxu0 %v382
      %640 = vmatprep.subr.mxu0 %v385
      %641 = vmatpush1.msra.mxu0 %v384
      %642 = vmatprep.mubr.f32.mxu0 %v195
      %643 = vmatmul.mubr.f32.gmra.mrb[0].mxu0 %v194
      %v644 = vpop.f32.mrb[0].mxu0
      %v645 = vadd.f32 0.0, %v644
      %v646 = vpop.f32.mrb[0].mxu0
      %v647 = vadd.f32 0.0, %v646
      %648 = vmatprep.mubr.f32.mxu0 %v203
      %649 = vmatmul.mubr.f32.gmra.mrb[0].mxu0 %v202
      %v650 = vpop.f32.mrb[0].mxu0
      %v651 = vadd.f32 0.0, %v650
      %v652 = vpop.f32.mrb[0].mxu0
      %v653 = vadd.f32 0.0, %v652
      %654 = vmatprep.mubr.f32.mxu0 %v211
      %655 = vmatmul.mubr.f32.gmra.mrb[0].mxu0 %v210
      %v656 = vpop.f32.mrb[0].mxu0
      %v657 = vadd.f32 0.0, %v656
      %v658 = vpop.f32.mrb[0].mxu0
      %v659 = vadd.f32 0.0, %v658
      %660 = vmatprep.mubr.f32.mxu0 %v219
      %661 = vmatmul.mubr.f32.gmra.mrb[0].mxu0 %v218
      %v662 = vpop.f32.mrb[0].mxu0
      %v663 = vadd.f32 0.0, %v662
      %v664 = vpop.f32.mrb[0].mxu0
      %v665 = vadd.f32 0.0, %v664
      %666 = vmatprep.mubr.f32.mxu0 %v227
      %667 = vmatmul.mubr.f32.gmra.mrb[0].mxu0 %v226
      %v668 = vpop.f32.mrb[0].mxu0
      %v669 = vadd.f32 0.0, %v668
      %v670 = vpop.f32.mrb[0].mxu0
      %v671 = vadd.f32 0.0, %v670
      %672 = vmatprep.mubr.f32.mxu0 %v235
      %673 = vmatmul.mubr.f32.gmra.mrb[0].mxu0 %v234
      %v674 = vpop.f32.mrb[0].mxu0
      %v675 = vadd.f32 0.0, %v674
      %v676 = vpop.f32.mrb[0].mxu0
      %v677 = vadd.f32 0.0, %v676
      %678 = vmatprep.mubr.f32.mxu0 %v243
      %679 = vmatmul.mubr.f32.gmra.mrb[0].mxu0 %v242
      %v680 = vpop.f32.mrb[0].mxu0
      %v681 = vadd.f32 0.0, %v680
      %v682 = vpop.f32.mrb[0].mxu0
      %v683 = vadd.f32 0.0, %v682
      %684 = vmatprep.mubr.f32.mxu0 %v251
      %685 = vmatmul.mubr.f32.gmra.mrb[0].mxu0 %v250
      %v686 = vpop.f32.mrb[0].mxu0
      %v687 = vadd.f32 0.0, %v686
      %v688 = vpop.f32.mrb[0].mxu0
      %v689 = vadd.f32 0.0, %v688
      %690 = vmatprep.mubr.f32.mxu0 %v259
      %691 = vmatmul.mubr.f32.gmra.mrb[0].mxu0 %v258
      %v692 = vpop.f32.mrb[0].mxu0
      %v693 = vadd.f32 0.0, %v692
      %v694 = vpop.f32.mrb[0].mxu0
      %v695 = vadd.f32 0.0, %v694
      %696 = vmatprep.mubr.f32.mxu0 %v267
      %697 = vmatmul.mubr.f32.gmra.mrb[0].mxu0 %v266
      %v698 = vpop.f32.mrb[0].mxu0
      %v699 = vadd.f32 0.0, %v698
      %v700 = vpop.f32.mrb[0].mxu0
      %v701 = vadd.f32 0.0, %v700
      %702 = vmatprep.mubr.f32.mxu0 %v275
      %703 = vmatmul.mubr.f32.gmra.mrb[0].mxu0 %v274
      %v704 = vpop.f32.mrb[0].mxu0
      %v705 = vadd.f32 0.0, %v704
      %v706 = vpop.f32.mrb[0].mxu0
      %v707 = vadd.f32 0.0, %v706
      %708 = vmatprep.mubr.f32.mxu0 %v283
      %709 = vmatmul.mubr.f32.gmra.mrb[0].mxu0 %v282
      %v710 = vpop.f32.mrb[0].mxu0
      %v711 = vadd.f32 0.0, %v710
      %v712 = vpop.f32.mrb[0].mxu0
      %v713 = vadd.f32 0.0, %v712
      %714 = vmatprep.mubr.f32.mxu0 %v291
      %715 = vmatmul.mubr.f32.gmra.mrb[0].mxu0 %v290
      %v716 = vpop.f32.mrb[0].mxu0
      %v717 = vadd.f32 0.0, %v716
      %v718 = vpop.f32.mrb[0].mxu0
      %v719 = vadd.f32 0.0, %v718
      %720 = vmatprep.mubr.f32.mxu0 %v299
      %721 = vmatmul.mubr.f32.gmra.mrb[0].mxu0 %v298
      %v722 = vpop.f32.mrb[0].mxu0
      %v723 = vadd.f32 0.0, %v722
      %v724 = vpop.f32.mrb[0].mxu0
      %v725 = vadd.f32 0.0, %v724
      %726 = vmatprep.mubr.f32.mxu0 %v307
      %727 = vmatmul.mubr.f32.gmra.mrb[0].mxu0 %v306
      %v728 = vpop.f32.mrb[0].mxu0
      %v729 = vadd.f32 0.0, %v728
      %v730 = vpop.f32.mrb[0].mxu0
      %v731 = vadd.f32 0.0, %v730
      %732 = vmatprep.mubr.f32.mxu0 %v315
      %733 = vmatmul.mubr.f32.gmra.mrb[0].mxu0 %v314
      %v734 = vpop.f32.mrb[0].mxu0
      %v735 = vadd.f32 0.0, %v734
      %v736 = vpop.f32.mrb[0].mxu0
      %v737 = vadd.f32 0.0, %v736
      %738 = vdwg.mxu0
      %739 = vmatprep.subr.mxu0 %v387
      %740 = vmatpush1.msra.mxu0 %v386
      %741 = vmatprep.subr.mxu0 %v389
      %742 = vmatpush1.msra.mxu0 %v388
      %743 = vmatprep.subr.mxu0 %v391
      %744 = vmatpush1.msra.mxu0 %v390
      %745 = vmatprep.subr.mxu0 %v393
      %746 = vmatpush1.msra.mxu0 %v392
      %747 = vmatprep.subr.mxu0 %v395
      %748 = vmatpush1.msra.mxu0 %v394
      %749 = vmatprep.subr.mxu0 %v397
      %750 = vmatpush1.msra.mxu0 %v396
      %751 = vmatprep.subr.mxu0 %v399
      %752 = vmatpush1.msra.mxu0 %v398
      %753 = vmatprep.subr.mxu0 %v401
      %754 = vmatpush1.msra.mxu0 %v400
      %755 = vmatprep.subr.mxu0 %v403
      %756 = vmatpush1.msra.mxu0 %v402
      %757 = vmatprep.subr.mxu0 %v405
      %758 = vmatpush1.msra.mxu0 %v404
      %759 = vmatprep.subr.mxu0 %v407
      %760 = vmatpush1.msra.mxu0 %v406
      %761 = vmatprep.subr.mxu0 %v409
      %762 = vmatpush1.msra.mxu0 %v408
      %763 = vmatprep.subr.mxu0 %v411
      %764 = vmatpush1.msra.mxu0 %v410
      %765 = vmatprep.subr.mxu0 %v413
      %766 = vmatpush1.msra.mxu0 %v412
      %767 = vmatprep.subr.mxu0 %v415
      %768 = vmatpush1.msra.mxu0 %v414
      %769 = vmatprep.subr.mxu0 %v417
      %770 = vmatpush1.msra.mxu0 %v416
      %771 = vmatprep.subr.mxu0 %v419
      %772 = vmatpush1.msra.mxu0 %v418
      %773 = vmatprep.subr.mxu0 %v421
      %774 = vmatpush1.msra.mxu0 %v420
      %775 = vmatprep.subr.mxu0 %v423
      %776 = vmatpush1.msra.mxu0 %v422
      %777 = vmatprep.subr.mxu0 %v425
      %778 = vmatpush1.msra.mxu0 %v424
      %779 = vmatprep.subr.mxu0 %v427
      %780 = vmatpush1.msra.mxu0 %v426
      %781 = vmatprep.subr.mxu0 %v429
      %782 = vmatpush1.msra.mxu0 %v428
      %783 = vmatprep.subr.mxu0 %v431
      %784 = vmatpush1.msra.mxu0 %v430
      %785 = vmatprep.subr.mxu0 %v433
      %786 = vmatpush1.msra.mxu0 %v432
      %787 = vmatprep.subr.mxu0 %v435
      %788 = vmatpush1.msra.mxu0 %v434
      %789 = vmatprep.subr.mxu0 %v437
      %790 = vmatpush1.msra.mxu0 %v436
      %791 = vmatprep.subr.mxu0 %v439
      %792 = vmatpush1.msra.mxu0 %v438
      %793 = vmatprep.subr.mxu0 %v441
      %794 = vmatpush1.msra.mxu0 %v440
      %795 = vmatprep.subr.mxu0 %v443
      %796 = vmatpush1.msra.mxu0 %v442
      %797 = vmatprep.subr.mxu0 %v445
      %798 = vmatpush1.msra.mxu0 %v444
      %799 = vmatprep.subr.mxu0 %v447
      %800 = vmatpush1.msra.mxu0 %v446
      %801 = vmatprep.subr.mxu0 %v449
      %802 = vmatpush1.msra.mxu0 %v448
      %803 = vmatprep.mubr.f32.mxu0 %v197
      %804 = vmatmul.mubr.f32.gmra.mrb[0].mxu0 %v196
      %v805 = vpop.f32.mrb[0].mxu0
      %v806 = vadd.f32 %v645, %v805
      %v807 = vpop.f32.mrb[0].mxu0
      %v808 = vadd.f32 %v647, %v807
      %809 = vmatprep.mubr.f32.mxu0 %v205
      %810 = vmatmul.mubr.f32.gmra.mrb[0].mxu0 %v204
      %v811 = vpop.f32.mrb[0].mxu0
      %v812 = vadd.f32 %v651, %v811
      %v813 = vpop.f32.mrb[0].mxu0
      %v814 = vadd.f32 %v653, %v813
      %815 = vmatprep.mubr.f32.mxu0 %v213
      %816 = vmatmul.mubr.f32.gmra.mrb[0].mxu0 %v212
      %v817 = vpop.f32.mrb[0].mxu0
      %v818 = vadd.f32 %v657, %v817
      %v819 = vpop.f32.mrb[0].mxu0
      %v820 = vadd.f32 %v659, %v819
      %821 = vmatprep.mubr.f32.mxu0 %v221
      %822 = vmatmul.mubr.f32.gmra.mrb[0].mxu0 %v220
      %v823 = vpop.f32.mrb[0].mxu0
      %v824 = vadd.f32 %v663, %v823
      %v825 = vpop.f32.mrb[0].mxu0
      %v826 = vadd.f32 %v665, %v825
      %827 = vmatprep.mubr.f32.mxu0 %v229
      %828 = vmatmul.mubr.f32.gmra.mrb[0].mxu0 %v228
      %v829 = vpop.f32.mrb[0].mxu0
      %v830 = vadd.f32 %v669, %v829
      %v831 = vpop.f32.mrb[0].mxu0
      %v832 = vadd.f32 %v671, %v831
      %833 = vmatprep.mubr.f32.mxu0 %v237
      %834 = vmatmul.mubr.f32.gmra.mrb[0].mxu0 %v236
      %v835 = vpop.f32.mrb[0].mxu0
      %v836 = vadd.f32 %v675, %v835
      %v837 = vpop.f32.mrb[0].mxu0
      %v838 = vadd.f32 %v677, %v837
      %839 = vmatprep.mubr.f32.mxu0 %v245
      %840 = vmatmul.mubr.f32.gmra.mrb[0].mxu0 %v244
      %v841 = vpop.f32.mrb[0].mxu0
      %v842 = vadd.f32 %v681, %v841
      %v843 = vpop.f32.mrb[0].mxu0
      %v844 = vadd.f32 %v683, %v843
      %845 = vmatprep.mubr.f32.mxu0 %v253
      %846 = vmatmul.mubr.f32.gmra.mrb[0].mxu0 %v252
      %v847 = vpop.f32.mrb[0].mxu0
      %v848 = vadd.f32 %v687, %v847
      %v849 = vpop.f32.mrb[0].mxu0
      %v850 = vadd.f32 %v689, %v849
      %851 = vmatprep.mubr.f32.mxu0 %v261
      %852 = vmatmul.mubr.f32.gmra.mrb[0].mxu0 %v260
      %v853 = vpop.f32.mrb[0].mxu0
      %v854 = vadd.f32 %v693, %v853
      %v855 = vpop.f32.mrb[0].mxu0
      %v856 = vadd.f32 %v695, %v855
      %857 = vmatprep.mubr.f32.mxu0 %v269
      %858 = vmatmul.mubr.f32.gmra.mrb[0].mxu0 %v268
      %v859 = vpop.f32.mrb[0].mxu0
      %v860 = vadd.f32 %v699, %v859
      %v861 = vpop.f32.mrb[0].mxu0
      %v862 = vadd.f32 %v701, %v861
      %863 = vmatprep.mubr.f32.mxu0 %v277
      %864 = vmatmul.mubr.f32.gmra.mrb[0].mxu0 %v276
      %v865 = vpop.f32.mrb[0].mxu0
      %v866 = vadd.f32 %v705, %v865
      %v867 = vpop.f32.mrb[0].mxu0
      %v868 = vadd.f32 %v707, %v867
      %869 = vmatprep.mubr.f32.mxu0 %v285
      %870 = vmatmul.mubr.f32.gmra.mrb[0].mxu0 %v284
      %v871 = vpop.f32.mrb[0].mxu0
      %v872 = vadd.f32 %v711, %v871
      %v873 = vpop.f32.mrb[0].mxu0
      %v874 = vadd.f32 %v713, %v873
      %875 = vmatprep.mubr.f32.mxu0 %v293
      %876 = vmatmul.mubr.f32.gmra.mrb[0].mxu0 %v292
      %v877 = vpop.f32.mrb[0].mxu0
      %v878 = vadd.f32 %v717, %v877
      %v879 = vpop.f32.mrb[0].mxu0
      %v880 = vadd.f32 %v719, %v879
      %881 = vmatprep.mubr.f32.mxu0 %v301
      %882 = vmatmul.mubr.f32.gmra.mrb[0].mxu0 %v300
      %v883 = vpop.f32.mrb[0].mxu0
      %v884 = vadd.f32 %v723, %v883
      %v885 = vpop.f32.mrb[0].mxu0
      %v886 = vadd.f32 %v725, %v885
      %887 = vmatprep.mubr.f32.mxu0 %v309
      %888 = vmatmul.mubr.f32.gmra.mrb[0].mxu0 %v308
      %v889 = vpop.f32.mrb[0].mxu0
      %v890 = vadd.f32 %v729, %v889
      %v891 = vpop.f32.mrb[0].mxu0
      %v892 = vadd.f32 %v731, %v891
      %893 = vmatprep.mubr.f32.mxu0 %v317
      %894 = vmatmul.mubr.f32.gmra.mrb[0].mxu0 %v316
      %v895 = vpop.f32.mrb[0].mxu0
      %v896 = vadd.f32 %v735, %v895
      %v897 = vpop.f32.mrb[0].mxu0
      %v898 = vadd.f32 %v737, %v897
      %899 = vdwg.mxu0
      %900 = vmatprep.subr.mxu0 %v451
      %901 = vmatpush1.msra.mxu0 %v450
      %902 = vmatprep.subr.mxu0 %v453
      %903 = vmatpush1.msra.mxu0 %v452
      %904 = vmatprep.subr.mxu0 %v455
      %905 = vmatpush1.msra.mxu0 %v454
      %906 = vmatprep.subr.mxu0 %v457
      %907 = vmatpush1.msra.mxu0 %v456
      %908 = vmatprep.subr.mxu0 %v459
      %909 = vmatpush1.msra.mxu0 %v458
      %910 = vmatprep.subr.mxu0 %v461
      %911 = vmatpush1.msra.mxu0 %v460
      %912 = vmatprep.subr.mxu0 %v463
      %913 = vmatpush1.msra.mxu0 %v462
      %914 = vmatprep.subr.mxu0 %v465
      %915 = vmatpush1.msra.mxu0 %v464
      %916 = vmatprep.subr.mxu0 %v467
      %917 = vmatpush1.msra.mxu0 %v466
      %918 = vmatprep.subr.mxu0 %v469
      %919 = vmatpush1.msra.mxu0 %v468
      %920 = vmatprep.subr.mxu0 %v471
      %921 = vmatpush1.msra.mxu0 %v470
      %922 = vmatprep.subr.mxu0 %v473
      %923 = vmatpush1.msra.mxu0 %v472
      %924 = vmatprep.subr.mxu0 %v475
      %925 = vmatpush1.msra.mxu0 %v474
      %926 = vmatprep.subr.mxu0 %v477
      %927 = vmatpush1.msra.mxu0 %v476
      %928 = vmatprep.subr.mxu0 %v479
      %929 = vmatpush1.msra.mxu0 %v478
      %930 = vmatprep.subr.mxu0 %v481
      %931 = vmatpush1.msra.mxu0 %v480
      %932 = vmatprep.subr.mxu0 %v483
      %933 = vmatpush1.msra.mxu0 %v482
      %934 = vmatprep.subr.mxu0 %v485
      %935 = vmatpush1.msra.mxu0 %v484
      %936 = vmatprep.subr.mxu0 %v487
      %937 = vmatpush1.msra.mxu0 %v486
      %938 = vmatprep.subr.mxu0 %v489
      %939 = vmatpush1.msra.mxu0 %v488
      %940 = vmatprep.subr.mxu0 %v491
      %941 = vmatpush1.msra.mxu0 %v490
      %942 = vmatprep.subr.mxu0 %v493
      %943 = vmatpush1.msra.mxu0 %v492
      %944 = vmatprep.subr.mxu0 %v495
      %945 = vmatpush1.msra.mxu0 %v494
      %946 = vmatprep.subr.mxu0 %v497
      %947 = vmatpush1.msra.mxu0 %v496
      %948 = vmatprep.subr.mxu0 %v499
      %949 = vmatpush1.msra.mxu0 %v498
      %950 = vmatprep.subr.mxu0 %v501
      %951 = vmatpush1.msra.mxu0 %v500
      %952 = vmatprep.subr.mxu0 %v503
      %953 = vmatpush1.msra.mxu0 %v502
      %954 = vmatprep.subr.mxu0 %v505
      %955 = vmatpush1.msra.mxu0 %v504
      %956 = vmatprep.subr.mxu0 %v507
      %957 = vmatpush1.msra.mxu0 %v506
      %958 = vmatprep.subr.mxu0 %v509
      %959 = vmatpush1.msra.mxu0 %v508
      %960 = vmatprep.subr.mxu0 %v511
      %961 = vmatpush1.msra.mxu0 %v510
      %962 = vmatprep.subr.mxu0 %v513
      %963 = vmatpush1.msra.mxu0 %v512
      %964 = vmatprep.mubr.f32.mxu0 %v199
      %965 = vmatmul.mubr.f32.gmra.mrb[0].mxu0 %v198
      %v966 = vpop.f32.mrb[0].mxu0
      %v967 = vadd.f32 %v806, %v966
      %v968 = vpop.f32.mrb[0].mxu0
      %v969 = vadd.f32 %v808, %v968
      %970 = vmatprep.mubr.f32.mxu0 %v207
      %971 = vmatmul.mubr.f32.gmra.mrb[0].mxu0 %v206
      %v972 = vpop.f32.mrb[0].mxu0
      %v973 = vadd.f32 %v812, %v972
      %v974 = vpop.f32.mrb[0].mxu0
      %v975 = vadd.f32 %v814, %v974
      %976 = vmatprep.mubr.f32.mxu0 %v215
      %977 = vmatmul.mubr.f32.gmra.mrb[0].mxu0 %v214
      %v978 = vpop.f32.mrb[0].mxu0
      %v979 = vadd.f32 %v818, %v978
      %v980 = vpop.f32.mrb[0].mxu0
      %v981 = vadd.f32 %v820, %v980
      %982 = vmatprep.mubr.f32.mxu0 %v223
      %983 = vmatmul.mubr.f32.gmra.mrb[0].mxu0 %v222
      %v984 = vpop.f32.mrb[0].mxu0
      %v985 = vadd.f32 %v824, %v984
      %v986 = vpop.f32.mrb[0].mxu0
      %v987 = vadd.f32 %v826, %v986
      %988 = vmatprep.mubr.f32.mxu0 %v231
      %989 = vmatmul.mubr.f32.gmra.mrb[0].mxu0 %v230
      %v990 = vpop.f32.mrb[0].mxu0
      %v991 = vadd.f32 %v830, %v990
      %v992 = vpop.f32.mrb[0].mxu0
      %v993 = vadd.f32 %v832, %v992
      %994 = vmatprep.mubr.f32.mxu0 %v239
      %995 = vmatmul.mubr.f32.gmra.mrb[0].mxu0 %v238
      %v996 = vpop.f32.mrb[0].mxu0
      %v997 = vadd.f32 %v836, %v996
      %v998 = vpop.f32.mrb[0].mxu0
      %v999 = vadd.f32 %v838, %v998
      %1000 = vmatprep.mubr.f32.mxu0 %v247
      %1001 = vmatmul.mubr.f32.gmra.mrb[0].mxu0 %v246
      %v1002 = vpop.f32.mrb[0].mxu0
      %v1003 = vadd.f32 %v842, %v1002
      %v1004 = vpop.f32.mrb[0].mxu0
      %v1005 = vadd.f32 %v844, %v1004
      %1006 = vmatprep.mubr.f32.mxu0 %v255
      %1007 = vmatmul.mubr.f32.gmra.mrb[0].mxu0 %v254
      %v1008 = vpop.f32.mrb[0].mxu0
      %v1009 = vadd.f32 %v848, %v1008
      %v1010 = vpop.f32.mrb[0].mxu0
      %v1011 = vadd.f32 %v850, %v1010
      %1012 = vmatprep.mubr.f32.mxu0 %v263
      %1013 = vmatmul.mubr.f32.gmra.mrb[0].mxu0 %v262
      %v1014 = vpop.f32.mrb[0].mxu0
      %v1015 = vadd.f32 %v854, %v1014
      %v1016 = vpop.f32.mrb[0].mxu0
      %v1017 = vadd.f32 %v856, %v1016
      %1018 = vmatprep.mubr.f32.mxu0 %v271
      %1019 = vmatmul.mubr.f32.gmra.mrb[0].mxu0 %v270
      %v1020 = vpop.f32.mrb[0].mxu0
      %v1021 = vadd.f32 %v860, %v1020
      %v1022 = vpop.f32.mrb[0].mxu0
      %v1023 = vadd.f32 %v862, %v1022
      %1024 = vmatprep.mubr.f32.mxu0 %v279
      %1025 = vmatmul.mubr.f32.gmra.mrb[0].mxu0 %v278
      %v1026 = vpop.f32.mrb[0].mxu0
      %v1027 = vadd.f32 %v866, %v1026
      %v1028 = vpop.f32.mrb[0].mxu0
      %v1029 = vadd.f32 %v868, %v1028
      %1030 = vmatprep.mubr.f32.mxu0 %v287
      %1031 = vmatmul.mubr.f32.gmra.mrb[0].mxu0 %v286
      %v1032 = vpop.f32.mrb[0].mxu0
      %v1033 = vadd.f32 %v872, %v1032
      %v1034 = vpop.f32.mrb[0].mxu0
      %v1035 = vadd.f32 %v874, %v1034
      %1036 = vmatprep.mubr.f32.mxu0 %v295
      %1037 = vmatmul.mubr.f32.gmra.mrb[0].mxu0 %v294
      %v1038 = vpop.f32.mrb[0].mxu0
      %v1039 = vadd.f32 %v878, %v1038
      %v1040 = vpop.f32.mrb[0].mxu0
      %v1041 = vadd.f32 %v880, %v1040
      %1042 = vmatprep.mubr.f32.mxu0 %v303
      %1043 = vmatmul.mubr.f32.gmra.mrb[0].mxu0 %v302
      %v1044 = vpop.f32.mrb[0].mxu0
      %v1045 = vadd.f32 %v884, %v1044
      %v1046 = vpop.f32.mrb[0].mxu0
      %v1047 = vadd.f32 %v886, %v1046
      %1048 = vmatprep.mubr.f32.mxu0 %v311
      %1049 = vmatmul.mubr.f32.gmra.mrb[0].mxu0 %v310
      %v1050 = vpop.f32.mrb[0].mxu0
      %v1051 = vadd.f32 %v890, %v1050
      %v1052 = vpop.f32.mrb[0].mxu0
      %v1053 = vadd.f32 %v892, %v1052
      %1054 = vmatprep.mubr.f32.mxu0 %v319
      %1055 = vmatmul.mubr.f32.gmra.mrb[0].mxu0 %v318
      %v1056 = vpop.f32.mrb[0].mxu0
      %v1057 = vadd.f32 %v896, %v1056
      %v1058 = vpop.f32.mrb[0].mxu0
      %v1059 = vadd.f32 %v898, %v1058
      %1060 = vdwg.mxu0
      %1061 = vmatprep.subr.mxu0 %v515
      %1062 = vmatpush1.msra.mxu0 %v514
      %1063 = vmatprep.subr.mxu0 %v517
      %1064 = vmatpush1.msra.mxu0 %v516
      %1065 = vmatprep.subr.mxu0 %v519
      %1066 = vmatpush1.msra.mxu0 %v518
      %1067 = vmatprep.subr.mxu0 %v521
      %1068 = vmatpush1.msra.mxu0 %v520
      %1069 = vmatprep.subr.mxu0 %v523
      %1070 = vmatpush1.msra.mxu0 %v522
      %1071 = vmatprep.subr.mxu0 %v525
      %1072 = vmatpush1.msra.mxu0 %v524
      %1073 = vmatprep.subr.mxu0 %v527
      %1074 = vmatpush1.msra.mxu0 %v526
      %1075 = vmatprep.subr.mxu0 %v529
      %1076 = vmatpush1.msra.mxu0 %v528
      %1077 = vmatprep.subr.mxu0 %v531
      %1078 = vmatpush1.msra.mxu0 %v530
      %1079 = vmatprep.subr.mxu0 %v533
      %1080 = vmatpush1.msra.mxu0 %v532
      %1081 = vmatprep.subr.mxu0 %v535
      %1082 = vmatpush1.msra.mxu0 %v534
      %1083 = vmatprep.subr.mxu0 %v537
      %1084 = vmatpush1.msra.mxu0 %v536
      %1085 = vmatprep.subr.mxu0 %v539
      %1086 = vmatpush1.msra.mxu0 %v538
      %1087 = vmatprep.subr.mxu0 %v541
      %1088 = vmatpush1.msra.mxu0 %v540
      %1089 = vmatprep.subr.mxu0 %v543
      %1090 = vmatpush1.msra.mxu0 %v542
      %1091 = vmatprep.subr.mxu0 %v545
      %1092 = vmatpush1.msra.mxu0 %v544
      %1093 = vmatprep.subr.mxu0 %v547
      %1094 = vmatpush1.msra.mxu0 %v546
      %1095 = vmatprep.subr.mxu0 %v549
      %1096 = vmatpush1.msra.mxu0 %v548
      %1097 = vmatprep.subr.mxu0 %v551
      %1098 = vmatpush1.msra.mxu0 %v550
      %1099 = vmatprep.subr.mxu0 %v553
      %1100 = vmatpush1.msra.mxu0 %v552
      %1101 = vmatprep.subr.mxu0 %v555
      %1102 = vmatpush1.msra.mxu0 %v554
      %1103 = vmatprep.subr.mxu0 %v557
      %1104 = vmatpush1.msra.mxu0 %v556
      %1105 = vmatprep.subr.mxu0 %v559
      %1106 = vmatpush1.msra.mxu0 %v558
      %1107 = vmatprep.subr.mxu0 %v561
      %1108 = vmatpush1.msra.mxu0 %v560
      %1109 = vmatprep.subr.mxu0 %v563
      %1110 = vmatpush1.msra.mxu0 %v562
      %1111 = vmatprep.subr.mxu0 %v565
      %1112 = vmatpush1.msra.mxu0 %v564
      %1113 = vmatprep.subr.mxu0 %v567
      %1114 = vmatpush1.msra.mxu0 %v566
      %1115 = vmatprep.subr.mxu0 %v569
      %1116 = vmatpush1.msra.mxu0 %v568
      %1117 = vmatprep.subr.mxu0 %v571
      %1118 = vmatpush1.msra.mxu0 %v570
      %1119 = vmatprep.subr.mxu0 %v573
      %1120 = vmatpush1.msra.mxu0 %v572
      %1121 = vmatprep.subr.mxu0 %v575
      %1122 = vmatpush1.msra.mxu0 %v574
      %1123 = vmatprep.subr.mxu0 %v577
      %1124 = vmatpush1.msra.mxu0 %v576
      %1125 = vmatprep.mubr.f32.mxu0 %v201
      %1126 = vmatmul.mubr.f32.gmra.mrb[0].mxu0 %v200
      %v1127 = vpop.f32.mrb[0].mxu0
      %v1128 = vadd.f32 %v967, %v1127
      %v1129 = vpop.f32.mrb[0].mxu0
      %v1130 = vadd.f32 %v969, %v1129
      %1131 = vmatprep.mubr.f32.mxu0 %v209
      %1132 = vmatmul.mubr.f32.gmra.mrb[0].mxu0 %v208
      %v1133 = vpop.f32.mrb[0].mxu0
      %v1134 = vadd.f32 %v973, %v1133
      %v1135 = vpop.f32.mrb[0].mxu0
      %v1136 = vadd.f32 %v975, %v1135
      %1137 = vmatprep.mubr.f32.mxu0 %v217
      %1138 = vmatmul.mubr.f32.gmra.mrb[0].mxu0 %v216
      %v1139 = vpop.f32.mrb[0].mxu0
      %v1140 = vadd.f32 %v979, %v1139
      %v1141 = vpop.f32.mrb[0].mxu0
      %v1142 = vadd.f32 %v981, %v1141
      %1143 = vmatprep.mubr.f32.mxu0 %v225
      %1144 = vmatmul.mubr.f32.gmra.mrb[0].mxu0 %v224
      %v1145 = vpop.f32.mrb[0].mxu0
      %v1146 = vadd.f32 %v985, %v1145
      %v1147 = vpop.f32.mrb[0].mxu0
      %v1148 = vadd.f32 %v987, %v1147
      %1149 = vmatprep.mubr.f32.mxu0 %v233
      %1150 = vmatmul.mubr.f32.gmra.mrb[0].mxu0 %v232
      %v1151 = vpop.f32.mrb[0].mxu0
      %v1152 = vadd.f32 %v991, %v1151
      %v1153 = vpop.f32.mrb[0].mxu0
      %v1154 = vadd.f32 %v993, %v1153
      %1155 = vmatprep.mubr.f32.mxu0 %v241
      %1156 = vmatmul.mubr.f32.gmra.mrb[0].mxu0 %v240
      %v1157 = vpop.f32.mrb[0].mxu0
      %v1158 = vadd.f32 %v997, %v1157
      %v1159 = vpop.f32.mrb[0].mxu0
      %v1160 = vadd.f32 %v999, %v1159
      %1161 = vmatprep.mubr.f32.mxu0 %v249
      %1162 = vmatmul.mubr.f32.gmra.mrb[0].mxu0 %v248
      %v1163 = vpop.f32.mrb[0].mxu0
      %v1164 = vadd.f32 %v1003, %v1163
      %v1165 = vpop.f32.mrb[0].mxu0
      %v1166 = vadd.f32 %v1005, %v1165
      %1167 = vmatprep.mubr.f32.mxu0 %v257
      %1168 = vmatmul.mubr.f32.gmra.mrb[0].mxu0 %v256
      %v1169 = vpop.f32.mrb[0].mxu0
      %v1170 = vadd.f32 %v1009, %v1169
      %v1171 = vpop.f32.mrb[0].mxu0
      %v1172 = vadd.f32 %v1011, %v1171
      %1173 = vmatprep.mubr.f32.mxu0 %v265
      %1174 = vmatmul.mubr.f32.gmra.mrb[0].mxu0 %v264
      %v1175 = vpop.f32.mrb[0].mxu0
      %v1176 = vadd.f32 %v1015, %v1175
      %v1177 = vpop.f32.mrb[0].mxu0
      %v1178 = vadd.f32 %v1017, %v1177
      %1179 = vmatprep.mubr.f32.mxu0 %v273
      %1180 = vmatmul.mubr.f32.gmra.mrb[0].mxu0 %v272
      %v1181 = vpop.f32.mrb[0].mxu0
      %v1182 = vadd.f32 %v1021, %v1181
      %v1183 = vpop.f32.mrb[0].mxu0
      %v1184 = vadd.f32 %v1023, %v1183
      %1185 = vmatprep.mubr.f32.mxu0 %v281
      %1186 = vmatmul.mubr.f32.gmra.mrb[0].mxu0 %v280
      %v1187 = vpop.f32.mrb[0].mxu0
      %v1188 = vadd.f32 %v1027, %v1187
      %v1189 = vpop.f32.mrb[0].mxu0
      %v1190 = vadd.f32 %v1029, %v1189
      %1191 = vmatprep.mubr.f32.mxu0 %v289
      %1192 = vmatmul.mubr.f32.gmra.mrb[0].mxu0 %v288
      %v1193 = vpop.f32.mrb[0].mxu0
      %v1194 = vadd.f32 %v1033, %v1193
      %v1195 = vpop.f32.mrb[0].mxu0
      %v1196 = vadd.f32 %v1035, %v1195
      %1197 = vmatprep.mubr.f32.mxu0 %v297
      %1198 = vmatmul.mubr.f32.gmra.mrb[0].mxu0 %v296
      %v1199 = vpop.f32.mrb[0].mxu0
      %v1200 = vadd.f32 %v1039, %v1199
      %v1201 = vpop.f32.mrb[0].mxu0
      %v1202 = vadd.f32 %v1041, %v1201
      %1203 = vmatprep.mubr.f32.mxu0 %v305
      %1204 = vmatmul.mubr.f32.gmra.mrb[0].mxu0 %v304
      %v1205 = vpop.f32.mrb[0].mxu0
      %v1206 = vadd.f32 %v1045, %v1205
      %v1207 = vpop.f32.mrb[0].mxu0
      %v1208 = vadd.f32 %v1047, %v1207
      %1209 = vmatprep.mubr.f32.mxu0 %v313
      %1210 = vmatmul.mubr.f32.gmra.mrb[0].mxu0 %v312
      %v1211 = vpop.f32.mrb[0].mxu0
      %v1212 = vadd.f32 %v1051, %v1211
      %v1213 = vpop.f32.mrb[0].mxu0
      %v1214 = vadd.f32 %v1053, %v1213
      %1215 = vmatprep.mubr.f32.mxu0 %v321
      %1216 = vmatmul.mubr.f32.gmra.mrb[0].mxu0 %v320
      %v1217 = vpop.f32.mrb[0].mxu0
      %v1218 = vadd.f32 %v1057, %v1217
      %v1219 = vpop.f32.mrb[0].mxu0
      %v1220 = vadd.f32 %v1059, %v1219
      %1221 = vdwg.mxu0
      %1222 = vst [vmem:[%s192] sm:$0xff] %v1128
      %vm1223 = vcmask 556032
      %1224 = vst.msk [vmem:[%s192 + $0x8] sm:$0xff] %vm1223, %v1130
      %1225 = vst [vmem:[%s192 + $0x10] sm:$0xff] %v1134
      %1226 = vst.msk [vmem:[%s192 + $0x18] sm:$0xff] %vm1223, %v1136
      %1227 = vst [vmem:[%s192 + $0x20] sm:$0xff] %v1140
      %1228 = vst.msk [vmem:[%s192 + $0x28] sm:$0xff] %vm1223, %v1142
      %1229 = vst [vmem:[%s192 + $0x30] sm:$0xff] %v1146
      %1230 = vst.msk [vmem:[%s192 + $0x38] sm:$0xff] %vm1223, %v1148
      %1231 = vst [vmem:[%s192 + $0x40] sm:$0xff] %v1152
      %1232 = vst.msk [vmem:[%s192 + $0x48] sm:$0xff] %vm1223, %v1154
      %1233 = vst [vmem:[%s192 + $0x50] sm:$0xff] %v1158
      %1234 = vst.msk [vmem:[%s192 + $0x58] sm:$0xff] %vm1223, %v1160
      %1235 = vst [vmem:[%s192 + $0x60] sm:$0xff] %v1164
      %1236 = vst.msk [vmem:[%s192 + $0x68] sm:$0xff] %vm1223, %v1166
      %1237 = vst [vmem:[%s192 + $0x70] sm:$0xff] %v1170
      %1238 = vst.msk [vmem:[%s192 + $0x78] sm:$0xff] %vm1223, %v1172
      %1239 = vst [vmem:[%s192 + $0x80] sm:$0xff] %v1176
      %1240 = vst.msk [vmem:[%s192 + $0x88] sm:$0xff] %vm1223, %v1178
      %1241 = vst [vmem:[%s192 + $0x90] sm:$0xff] %v1182
      %1242 = vst.msk [vmem:[%s192 + $0x98] sm:$0xff] %vm1223, %v1184
      %1243 = vst [vmem:[%s192 + $0xa0] sm:$0xff] %v1188
      %1244 = vst.msk [vmem:[%s192 + $0xa8] sm:$0xff] %vm1223, %v1190
      %1245 = vst [vmem:[%s192 + $0xb0] sm:$0xff] %v1194
      %1246 = vst.msk [vmem:[%s192 + $0xb8] sm:$0xff] %vm1223, %v1196
      %1247 = vst [vmem:[%s192 + $0xc0] sm:$0xff] %v1200
      %1248 = vst.msk [vmem:[%s192 + $0xc8] sm:$0xff] %vm1223, %v1202
      %1249 = vst [vmem:[%s192 + $0xd0] sm:$0xff] %v1206
      %1250 = vst.msk [vmem:[%s192 + $0xd8] sm:$0xff] %vm1223, %v1208
      %1251 = vst [vmem:[%s192 + $0xe0] sm:$0xff] %v1212
      %1252 = vst.msk [vmem:[%s192 + $0xe8] sm:$0xff] %vm1223, %v1214
      %1253 = vst [vmem:[%s192 + $0xf0] sm:$0xff] %v1218
      %1254 = vst.msk [vmem:[%s192 + $0xf8] sm:$0xff] %vm1223, %v1220
      %s1255 = smul.u32 16, %s18
      %p1256 = scmp.lt.s32.totalorder %s17, 0
      %s1257 = scalar_select %p1256, %s17, 0
      %p1258 = scmp.lt.s32.totalorder %s1255, 31
      %s1259 = scalar_select %p1258, %s1255, 31
      %s1260 = smul.addr %s1259, 2
      %s1261 = smul.addr %s1257, 64
      %s1262 = sadd.s32 %s1260, %s1261
      %s1263 = smul.addr %s1262, 8
      %s1264 = scalar_lea.vmem %s2, %s1263
      // Predicated region
      $region29: #{tpu_custom_call.1} parent=27 // pred_check
        %p1265 = pneg %p97
      $region30: #{tpu_custom_call.1} parent=27 // pred_check_branch
        %1267 = sbr.rel (%p1265) target = $region32
      $region31: #{tpu_custom_call.1} parent=27 // pred_region
        %s1268 = smul.u32 16, %s18
      $region32: #{tpu_custom_call.1} parent=27 // pred_fallthru
        _
    $region28: #{tpu_custom_call.1} parent=5 // pred_fallthru
      _
    %p1269 = scmp.le.s32.totalorder 2, %s8
    // Predicated region
    $region33: #{tpu_custom_call.1} parent=5 // pred_check
      %p1270 = pneg %p1269
    $region34: #{tpu_custom_call.1} parent=5 // pred_check_branch
      %1272 = sbr.rel (%p1270) target = $region36
    $region35: #{tpu_custom_call.1} parent=5 // pred_region
      %s1273 = ssub.s32 %s8, 2
      // Predicated region
      $region37: #{tpu_custom_call.1} parent=35 // pred_check
        %p1274 = pneg %p103
      $region38: #{tpu_custom_call.1} parent=35 // pred_check_branch
        %1276 = sbr.rel (%p1274) target = $region40
      $region39: #{tpu_custom_call.1} parent=35 // pred_region
        %s1277 = smul.u32 16, %s20
        %p1278 = scmp.lt.s32.totalorder %s19, 0
        %s1279 = scalar_select %p1278, %s19, 0
        %p1280 = scmp.lt.s32.totalorder %s1277, 31
        %s1281 = scalar_select %p1280, %s1277, 31
        %s1282 = smul.addr %s1281, 2
        %s1283 = smul.addr %s1279, 64
        %s1284 = sadd.s32 %s1282, %s1283
        %s1285 = smul.addr %s1284, 8
        %s1286 = scalar_lea.vmem %s2, %s1285
      $region40: #{tpu_custom_call.1} parent=35 // pred_fallthru
        _
    $region36: #{tpu_custom_call.1} parent=5 // pred_fallthru
      _
  $region6: #{tpu_custom_call.1} parent=0 // loop_footer
    %s12 = sadd.s32 1, %s8
  $region7: #{tpu_custom_call.1} parent=0 // loop_footer_branch
    %7 = sbr.rel target = $region3
  $region8: #{tpu_custom_call.1} parent=0 // loop_exit
    _

</llo_original>
